<compile_context>
chip_gen: v6e
topology: v6e:2x2x1
jax: 0.10.0
libtpu: 0.0.40
codegen_flags: <defaults>
</compile_context>

<pallas_src>
import jax
import jax.numpy as jnp
from jax.experimental import pallas as pl
from jax.experimental.pallas import tpu as pltpu


def _make_residual_kernel(H, W, Cin):
    HW = H * W

    def kernel(x_ref, w_ref, b_ref, o_ref, cols_ref):
        """x_ref: (1, Cin, HW) bf16 | w_ref: (Cout, 9*Cin) bf16 |
        b_ref: (Cout, 1) f32 | o_ref: (1, Cout, HW) f32 |
        cols_ref: (9*Cin, HW) bf16 VMEM scratch (fully overwritten each step)."""
        x = x_ref[0]                                    # (Cin, HW), lane-dense

        # Column (w) index of every output pixel along the lane dim.  Pixels
        # whose west/east neighbour is outside the image row must see the
        # conv's zero padding instead of the flat-wrapped neighbour row.
        col = jax.lax.broadcasted_iota(jnp.int32, (1, HW), 1) % W
        not_first_col = col != 0            # valid when reading the dx = -1 tap
        not_last_col = col != (W - 1)       # valid when reading the dx = +1 tap

        def shifted(s):
            # y[:, r] = x[:, r + s] for 0 <= r + s < HW, else 0 (flat zero pad).
            if s == 0:
                return x
            zeros = jnp.zeros((Cin, abs(s)), x.dtype)
            if s > 0:
                return jnp.concatenate([x[:, s:], zeros], axis=1)
            return jnp.concatenate([zeros, x[:, :s]], axis=1)

        # Build the im2col matrix (K = 9*Cin on sublanes, pixels on lanes) with
        # sublane-aligned full-width stores; tap order matches w_ref's K layout.
        t = 0
        for oy in (-1, 0, 1):
            for ox in (-1, 0, 1):
                tap = shifted(oy * W + ox)
                if ox == 1:
                    tap = jnp.where(not_last_col, tap, jnp.zeros_like(tap))
                elif ox == -1:
                    tap = jnp.where(not_first_col, tap, jnp.zeros_like(tap))
                cols_ref[t * Cin:(t + 1) * Cin, :] = tap
                t += 1

        # Single MXU matmul: (Cout, 9*Cin) x (9*Cin, HW) -> f32 accumulator.
        acc = jnp.dot(w_ref[...], cols_ref[...],
                      preferred_element_type=jnp.float32)

        # Residual module's own compute: add (folded into weights/bias) + ReLU.
        out = jnp.maximum(acc + b_ref[...], 0.0)
        o_ref[0] = out.astype(o_ref.dtype)

    return kernel


def residual_forward(x_nchw, w_main, scale_m, bias_m, w_down, scale_d, bias_d):
    """x_nchw: (B,Cin,H,W) f32; w_main: (3,3,Cin,Cout) HWIO; w_down: (Cin,Cout).
    scale_*/bias_*: eval-mode BatchNorm folded into per-channel scale/bias."""
    B, Cin, H, W = x_nchw.shape
    Cout = w_main.shape[-1]
    HW = H * W

    # Fold BN scales into the conv weights, fuse the 1x1 downsample into the
    # center tap of the 3x3 conv, and combine the two biases (all exact).
    wm = w_main * scale_m                          # (3,3,Cin,Cout) * (Cout,)
    wm = wm.at[1, 1].add(w_down * scale_d)         # center tap += scaled 1x1
    # Kernel weight layout: (Cout, 9*Cin) with K index = (dy*3 + dx)*Cin + ci.
    w_t = wm.reshape(9, Cin, Cout).transpose(2, 0, 1).reshape(Cout, 9 * Cin)
    b_fused = (bias_m + bias_d).reshape(Cout, 1).astype(jnp.float32)

    # bf16 operands (halve HBM traffic, native MXU dtype); f32 epilogue.
    x_flat = x_nchw.reshape(B, Cin, HW).astype(jnp.bfloat16)    # free NCHW view
    w_bf16 = w_t.astype(jnp.bfloat16)

    out = pl.pallas_call(
        _make_residual_kernel(H, W, Cin),
        out_shape=jax.ShapeDtypeStruct((B, Cout, HW), jnp.float32),
        grid_spec=pltpu.PrefetchScalarGridSpec(
            num_scalar_prefetch=0,
            grid=(B,),
            in_specs=[
                pl.BlockSpec((1, Cin, HW), lambda b: (b, 0, 0)),
                pl.BlockSpec((Cout, 9 * Cin), lambda b: (0, 0)),
                pl.BlockSpec((Cout, 1), lambda b: (0, 0)),
            ],
            out_specs=pl.BlockSpec((1, Cout, HW), lambda b: (b, 0, 0)),
            scratch_shapes=[pltpu.VMEM((9 * Cin, HW), jnp.bfloat16)],
        ),
        compiler_params=pltpu.CompilerParams(
            dimension_semantics=("parallel",),
        ),
    )(x_flat, w_bf16, b_fused)

    return out.reshape(B, Cout, H, W)


def _reference(x_nchw, w_main, scale_m, bias_m, w_down, scale_d, bias_d):
    """Unfused f32 reference: conv3x3+BN, conv1x1+BN, add, relu (NCHW in/out)."""
    x_nhwc = jnp.transpose(x_nchw, (0, 2, 3, 1))
    dn = jax.lax.conv_dimension_numbers(x_nhwc.shape, w_main.shape,
                                        ('NHWC', 'HWIO', 'NHWC'))
    main = jax.lax.conv_general_dilated(x_nhwc, w_main, (1, 1), 'SAME',
                                        dimension_numbers=dn)
    main = main * scale_m + bias_m
    ident = jnp.einsum('bhwc,co->bhwo', x_nhwc, w_down) * scale_d + bias_d
    out_nhwc = jnp.maximum(main + ident, 0.0)
    return jnp.transpose(out_nhwc, (0, 3, 1, 2))


def _fold_bn(gamma, beta, mean, var, eps=1e-5):
    scale = gamma / jnp.sqrt(var + eps)
    bias = beta - mean * scale
    return scale, bias


if __name__ == "__main__":
    B, H, W, Cin, Cout = 2, 16, 16, 8, 16
    key = jax.random.PRNGKey(0)
    ks = jax.random.split(key, 10)

    # input in PyTorch's native NCHW layout [B, Cin, H, W]
    x_nchw = jax.random.normal(ks[0], (B, Cin, H, W), jnp.float32)

    # main branch params (Conv3x3 no-bias + BatchNorm eval)
    w_main = jax.random.normal(ks[1], (3, 3, Cin, Cout), jnp.float32) * 0.1
    gm = 1.0 + 0.1 * jax.random.normal(ks[2], (Cout,), jnp.float32)
    btm = 0.1 * jax.random.normal(ks[3], (Cout,), jnp.float32)
    mum = 0.1 * jax.random.normal(ks[4], (Cout,), jnp.float32)
    vam = 0.5 + jax.random.uniform(ks[5], (Cout,), jnp.float32)
    scale_m, bias_m = _fold_bn(gm, btm, mum, vam)

    # downsample params (Conv1x1 no-bias + BatchNorm eval)
    w_down = jax.random.normal(ks[6], (Cin, Cout), jnp.float32) * 0.1
    gd = 1.0 + 0.1 * jax.random.normal(ks[7], (Cout,), jnp.float32)
    btd = 0.1 * jax.random.normal(ks[8], (Cout,), jnp.float32)
    mud = 0.1 * jax.random.normal(ks[9], (Cout,), jnp.float32)
    vad = jnp.full((Cout,), 1.0, jnp.float32)
    scale_d, bias_d = _fold_bn(gd, btd, mud, vad)

    out = residual_forward(x_nchw, w_main, scale_m, bias_m,
                           w_down, scale_d, bias_d)
    out = jax.block_until_ready(out)

    ref = _reference(x_nchw, w_main, scale_m, bias_m,
                     w_down, scale_d, bias_d)
    assert out.shape == (B, Cout, H, W)
    # bf16 activations/weights (per perf review) vs f32 reference.
    assert jnp.allclose(out, ref, atol=2e-2, rtol=2e-2), "mismatch vs reference"

    print("KERNEL_OK")
</pallas_src>

<mosaic_0001>
module attributes {stable_mosaic.version = 11 : i64} {
  func.func @kernel(%arg0: i32, %arg1: memref<1x8x256xbf16, #tpu.memory_space<vmem>>, %arg2: memref<16x72xbf16, #tpu.memory_space<vmem>>, %arg3: memref<16x1xf32, #tpu.memory_space<vmem>>, %arg4: memref<1x16x256xf32, #tpu.memory_space<vmem>>, %arg5: memref<72x256xbf16, #tpu.memory_space<vmem>>) attributes {dimension_semantics = [#tpu.dimension_semantics<parallel>], iteration_bounds = array<i64: 2>, scalar_prefetch = 0 : i64, scratch_operands = 1 : i64, tpu.core_type = #tpu.core_type<tc>, window_params = [{transform_indices = @transform_0, window_bounds = array<i64: 1, 8, 256>}, {pipeline_mode = #tpu.pipeline_mode<synchronous>, transform_indices = @transform_1, window_bounds = array<i64: 16, 72>}, {pipeline_mode = #tpu.pipeline_mode<synchronous>, transform_indices = @transform_2, window_bounds = array<i64: 16, 1>}, {transform_indices = @transform_3, window_bounds = array<i64: 1, 16, 256>}]} {
    %c0 = arith.constant 0 : index
    %c0_0 = arith.constant 0 : index
    %c0_1 = arith.constant 0 : index
    %0 = vector.load %arg1[%c0, %c0_0, %c0_1] : memref<1x8x256xbf16, #tpu.memory_space<vmem>>, vector<1x8x256xbf16>
    %1 = vector.shape_cast %0 : vector<1x8x256xbf16> to vector<8x256xbf16>
    %2 = tpu.iota {dimensions = array<i32: 1>} : vector<1x256xi32>
    %c16_i32 = arith.constant 16 : i32
    %c0_i32 = arith.constant 0 : i32
    %3 = arith.cmpi eq, %c16_i32, %c0_i32 : i32
    %c1_i32 = arith.constant 1 : i32
    %4 = arith.select %3, %c1_i32, %c16_i32 : i32
    %5 = vector.broadcast %4 : i32 to vector<1x256xi32>
    %6 = arith.remsi %2, %5 : vector<1x256xi32>
    %c0_i32_2 = arith.constant 0 : i32
    %7 = vector.broadcast %c0_i32_2 : i32 to vector<1x256xi32>
    %8 = arith.cmpi ne, %6, %7 : vector<1x256xi32>
    %c0_i32_3 = arith.constant 0 : i32
    %9 = vector.broadcast %c0_i32_3 : i32 to vector<1x256xi32>
    %10 = arith.cmpi slt, %6, %9 : vector<1x256xi32>
    %c0_i32_4 = arith.constant 0 : i32
    %11 = arith.cmpi slt, %4, %c0_i32_4 : i32
    %12 = vector.broadcast %11 : i1 to vector<1x256xi1>
    %13 = vector.broadcast %12 : vector<1x256xi1> to vector<1x256xi1>
    %14 = arith.xori %10, %13 : vector<1x256xi1>
    %15 = arith.andi %14, %8 : vector<1x256xi1>
    %16 = vector.broadcast %4 : i32 to vector<1x256xi32>
    %17 = arith.addi %6, %16 : vector<1x256xi32>
    %18 = arith.select %15, %17, %6 : vector<1x256xi1>, vector<1x256xi32>
    %c0_i32_5 = arith.constant 0 : i32
    %19 = vector.broadcast %c0_i32_5 : i32 to vector<1x256xi32>
    %20 = arith.cmpi ne, %18, %19 : vector<1x256xi32>
    %c15_i32 = arith.constant 15 : i32
    %21 = vector.broadcast %c15_i32 : i32 to vector<1x256xi32>
    %22 = arith.cmpi ne, %18, %21 : vector<1x256xi32>
    %cst = arith.constant 0.000000e+00 : bf16
    %23 = vector.broadcast %cst : bf16 to vector<8x17xbf16>
    %24 = vector.extract_strided_slice %1 {offsets = [0, 0], sizes = [8, 239], strides = [1, 1]} : vector<8x256xbf16> to vector<8x239xbf16>
    %25 = tpu.concatenate %23, %24 in 1 : vector<8x17xbf16>, vector<8x239xbf16> -> vector<8x256xbf16>
    %cst_6 = arith.constant 0.000000e+00 : bf16
    %26 = vector.broadcast %cst_6 : bf16 to vector<8x256xbf16>
    %27 = vector.shape_cast %20 : vector<1x256xi1> to vector<1x256xi1>
    %28 = vector.broadcast %27 : vector<1x256xi1> to vector<8x256xi1>
    %29 = arith.select %28, %25, %26 : vector<8x256xi1>, vector<8x256xbf16>
    %c0_7 = arith.constant 0 : index
    %c0_8 = arith.constant 0 : index
    %30 = vector.load %arg5[%c0_7, %c0_8] : memref<72x256xbf16, #tpu.memory_space<vmem>>, vector<8x256xbf16>
    tpu.vector_store %arg5[%c0_7, %c0_8], %29 {strides = array<i32>} : memref<72x256xbf16, #tpu.memory_space<vmem>>, vector<8x256xbf16>,
    %cst_9 = arith.constant 0.000000e+00 : bf16
    %31 = vector.broadcast %cst_9 : bf16 to vector<8x16xbf16>
    %32 = vector.extract_strided_slice %1 {offsets = [0, 0], sizes = [8, 240], strides = [1, 1]} : vector<8x256xbf16> to vector<8x240xbf16>
    %33 = tpu.concatenate %31, %32 in 1 : vector<8x16xbf16>, vector<8x240xbf16> -> vector<8x256xbf16>
    %c8 = arith.constant 8 : index
    %c0_10 = arith.constant 0 : index
    %34 = vector.load %arg5[%c8, %c0_10] : memref<72x256xbf16, #tpu.memory_space<vmem>>, vector<8x256xbf16>
    tpu.vector_store %arg5[%c8, %c0_10], %33 {strides = array<i32>} : memref<72x256xbf16, #tpu.memory_space<vmem>>, vector<8x256xbf16>,
    %cst_11 = arith.constant 0.000000e+00 : bf16
    %35 = vector.broadcast %cst_11 : bf16 to vector<8x15xbf16>
    %36 = vector.extract_strided_slice %1 {offsets = [0, 0], sizes = [8, 241], strides = [1, 1]} : vector<8x256xbf16> to vector<8x241xbf16>
    %37 = tpu.concatenate %35, %36 in 1 : vector<8x15xbf16>, vector<8x241xbf16> -> vector<8x256xbf16>
    %cst_12 = arith.constant 0.000000e+00 : bf16
    %38 = vector.broadcast %cst_12 : bf16 to vector<8x256xbf16>
    %39 = vector.shape_cast %22 : vector<1x256xi1> to vector<1x256xi1>
    %40 = vector.broadcast %39 : vector<1x256xi1> to vector<8x256xi1>
    %41 = arith.select %40, %37, %38 : vector<8x256xi1>, vector<8x256xbf16>
    %c16 = arith.constant 16 : index
    %c0_13 = arith.constant 0 : index
    %42 = vector.load %arg5[%c16, %c0_13] : memref<72x256xbf16, #tpu.memory_space<vmem>>, vector<8x256xbf16>
    tpu.vector_store %arg5[%c16, %c0_13], %41 {strides = array<i32>} : memref<72x256xbf16, #tpu.memory_space<vmem>>, vector<8x256xbf16>,
    %cst_14 = arith.constant 0.000000e+00 : bf16
    %43 = vector.broadcast %cst_14 : bf16 to vector<8x1xbf16>
    %44 = vector.extract_strided_slice %1 {offsets = [0, 0], sizes = [8, 255], strides = [1, 1]} : vector<8x256xbf16> to vector<8x255xbf16>
    %45 = tpu.concatenate %43, %44 in 1 : vector<8x1xbf16>, vector<8x255xbf16> -> vector<8x256xbf16>
    %cst_15 = arith.constant 0.000000e+00 : bf16
    %46 = vector.broadcast %cst_15 : bf16 to vector<8x256xbf16>
    %47 = vector.shape_cast %20 : vector<1x256xi1> to vector<1x256xi1>
    %48 = vector.broadcast %47 : vector<1x256xi1> to vector<8x256xi1>
    %49 = arith.select %48, %45, %46 : vector<8x256xi1>, vector<8x256xbf16>
    %c24 = arith.constant 24 : index
    %c0_16 = arith.constant 0 : index
    %50 = vector.load %arg5[%c24, %c0_16] : memref<72x256xbf16, #tpu.memory_space<vmem>>, vector<8x256xbf16>
    tpu.vector_store %arg5[%c24, %c0_16], %49 {strides = array<i32>} : memref<72x256xbf16, #tpu.memory_space<vmem>>, vector<8x256xbf16>,
    %c32 = arith.constant 32 : index
    %c0_17 = arith.constant 0 : index
    %51 = vector.load %arg5[%c32, %c0_17] : memref<72x256xbf16, #tpu.memory_space<vmem>>, vector<8x256xbf16>
    tpu.vector_store %arg5[%c32, %c0_17], %1 {strides = array<i32>} : memref<72x256xbf16, #tpu.memory_space<vmem>>, vector<8x256xbf16>,
    %cst_18 = arith.constant 0.000000e+00 : bf16
    %52 = vector.broadcast %cst_18 : bf16 to vector<8x1xbf16>
    %53 = vector.extract_strided_slice %1 {offsets = [0, 1], sizes = [8, 255], strides = [1, 1]} : vector<8x256xbf16> to vector<8x255xbf16>
    %54 = tpu.concatenate %53, %52 in 1 : vector<8x255xbf16>, vector<8x1xbf16> -> vector<8x256xbf16>
    %cst_19 = arith.constant 0.000000e+00 : bf16
    %55 = vector.broadcast %cst_19 : bf16 to vector<8x256xbf16>
    %56 = vector.shape_cast %22 : vector<1x256xi1> to vector<1x256xi1>
    %57 = vector.broadcast %56 : vector<1x256xi1> to vector<8x256xi1>
    %58 = arith.select %57, %54, %55 : vector<8x256xi1>, vector<8x256xbf16>
    %c40 = arith.constant 40 : index
    %c0_20 = arith.constant 0 : index
    %59 = vector.load %arg5[%c40, %c0_20] : memref<72x256xbf16, #tpu.memory_space<vmem>>, vector<8x256xbf16>
    tpu.vector_store %arg5[%c40, %c0_20], %58 {strides = array<i32>} : memref<72x256xbf16, #tpu.memory_space<vmem>>, vector<8x256xbf16>,
    %cst_21 = arith.constant 0.000000e+00 : bf16
    %60 = vector.broadcast %cst_21 : bf16 to vector<8x15xbf16>
    %61 = vector.extract_strided_slice %1 {offsets = [0, 15], sizes = [8, 241], strides = [1, 1]} : vector<8x256xbf16> to vector<8x241xbf16>
    %62 = tpu.concatenate %61, %60 in 1 : vector<8x241xbf16>, vector<8x15xbf16> -> vector<8x256xbf16>
    %cst_22 = arith.constant 0.000000e+00 : bf16
    %63 = vector.broadcast %cst_22 : bf16 to vector<8x256xbf16>
    %64 = vector.shape_cast %20 : vector<1x256xi1> to vector<1x256xi1>
    %65 = vector.broadcast %64 : vector<1x256xi1> to vector<8x256xi1>
    %66 = arith.select %65, %62, %63 : vector<8x256xi1>, vector<8x256xbf16>
    %c48 = arith.constant 48 : index
    %c0_23 = arith.constant 0 : index
    %67 = vector.load %arg5[%c48, %c0_23] : memref<72x256xbf16, #tpu.memory_space<vmem>>, vector<8x256xbf16>
    tpu.vector_store %arg5[%c48, %c0_23], %66 {strides = array<i32>} : memref<72x256xbf16, #tpu.memory_space<vmem>>, vector<8x256xbf16>,
    %cst_24 = arith.constant 0.000000e+00 : bf16
    %68 = vector.broadcast %cst_24 : bf16 to vector<8x16xbf16>
    %69 = vector.extract_strided_slice %1 {offsets = [0, 16], sizes = [8, 240], strides = [1, 1]} : vector<8x256xbf16> to vector<8x240xbf16>
    %70 = tpu.concatenate %69, %68 in 1 : vector<8x240xbf16>, vector<8x16xbf16> -> vector<8x256xbf16>
    %c56 = arith.constant 56 : index
    %c0_25 = arith.constant 0 : index
    %71 = vector.load %arg5[%c56, %c0_25] : memref<72x256xbf16, #tpu.memory_space<vmem>>, vector<8x256xbf16>
    tpu.vector_store %arg5[%c56, %c0_25], %70 {strides = array<i32>} : memref<72x256xbf16, #tpu.memory_space<vmem>>, vector<8x256xbf16>,
    %cst_26 = arith.constant 0.000000e+00 : bf16
    %72 = vector.broadcast %cst_26 : bf16 to vector<8x17xbf16>
    %73 = vector.extract_strided_slice %1 {offsets = [0, 17], sizes = [8, 239], strides = [1, 1]} : vector<8x256xbf16> to vector<8x239xbf16>
    %74 = tpu.concatenate %73, %72 in 1 : vector<8x239xbf16>, vector<8x17xbf16> -> vector<8x256xbf16>
    %cst_27 = arith.constant 0.000000e+00 : bf16
    %75 = vector.broadcast %cst_27 : bf16 to vector<8x256xbf16>
    %76 = vector.shape_cast %22 : vector<1x256xi1> to vector<1x256xi1>
    %77 = vector.broadcast %76 : vector<1x256xi1> to vector<8x256xi1>
    %78 = arith.select %77, %74, %75 : vector<8x256xi1>, vector<8x256xbf16>
    %c64 = arith.constant 64 : index
    %c0_28 = arith.constant 0 : index
    %79 = vector.load %arg5[%c64, %c0_28] : memref<72x256xbf16, #tpu.memory_space<vmem>>, vector<8x256xbf16>
    tpu.vector_store %arg5[%c64, %c0_28], %78 {strides = array<i32>} : memref<72x256xbf16, #tpu.memory_space<vmem>>, vector<8x256xbf16>,
    %c0_29 = arith.constant 0 : index
    %c0_30 = arith.constant 0 : index
    %80 = vector.load %arg2[%c0_29, %c0_30] : memref<16x72xbf16, #tpu.memory_space<vmem>>, vector<16x72xbf16>
    %c0_31 = arith.constant 0 : index
    %c0_32 = arith.constant 0 : index
    %81 = vector.load %arg5[%c0_31, %c0_32] : memref<72x256xbf16, #tpu.memory_space<vmem>>, vector<72x256xbf16>
    %cst_33 = arith.constant dense<0.000000e+00> : vector<16x256xf32>
    %82 = tpu.matmul %80, %81, %cst_33 {dimension_numbers = #tpu.dot_dimension_numbers<[1], [0], [0], [1], [0, 0, 1, 1], [], []>} : vector<16x72xbf16>, vector<72x256xbf16>, vector<16x256xf32> -> vector<16x256xf32>
    %c0_34 = arith.constant 0 : index
    %c0_35 = arith.constant 0 : index
    %83 = vector.load %arg3[%c0_34, %c0_35] : memref<16x1xf32, #tpu.memory_space<vmem>>, vector<16x1xf32>
    %84 = vector.broadcast %83 : vector<16x1xf32> to vector<16x256xf32>
    %85 = arith.addf %82, %84 : vector<16x256xf32>
    %cst_36 = arith.constant 0.000000e+00 : f32
    %86 = vector.broadcast %cst_36 : f32 to vector<16x256xf32>
    %87 = arith.maximumf %85, %86 : vector<16x256xf32>
    %c0_37 = arith.constant 0 : index
    %c0_38 = arith.constant 0 : index
    %c0_39 = arith.constant 0 : index
    %88 = vector.load %arg4[%c0_37, %c0_38, %c0_39] : memref<1x16x256xf32, #tpu.memory_space<vmem>>, vector<1x16x256xf32>
    %89 = vector.shape_cast %88 : vector<1x16x256xf32> to vector<16x256xf32>
    %90 = vector.shape_cast %87 : vector<16x256xf32> to vector<1x16x256xf32>
    tpu.vector_store %arg4[%c0_37, %c0_38, %c0_39], %90 {strides = array<i32>} : memref<1x16x256xf32, #tpu.memory_space<vmem>>, vector<1x16x256xf32>,
    return
  }
  func.func @transform_0(%arg0: i32) -> (i32, i32, i32) {
    %c0_i32 = arith.constant 0 : i32
    %c0_i32_0 = arith.constant 0 : i32
    %c0_i32_1 = arith.constant 0 : i32
    return %arg0, %c0_i32, %c0_i32_0 : i32, i32, i32
  }
  func.func @transform_1(%arg0: i32) -> (i32, i32) {
    %c0_i32 = arith.constant 0 : i32
    %c0_i32_0 = arith.constant 0 : i32
    %c0_i32_1 = arith.constant 0 : i32
    return %c0_i32, %c0_i32_0 : i32, i32
  }
  func.func @transform_2(%arg0: i32) -> (i32, i32) {
    %c0_i32 = arith.constant 0 : i32
    %c0_i32_0 = arith.constant 0 : i32
    %c0_i32_1 = arith.constant 0 : i32
    return %c0_i32, %c0_i32_0 : i32, i32
  }
  func.func @transform_3(%arg0: i32) -> (i32, i32, i32) {
    %c0_i32 = arith.constant 0 : i32
    %c0_i32_0 = arith.constant 0 : i32
    %c0_i32_1 = arith.constant 0 : i32
    return %arg0, %c0_i32, %c0_i32_0 : i32, i32, i32
  }
}

</mosaic_0001>

<llo_original>
// kernel: tpu_custom_call.1
$region0: #{tpu_custom_call.1}
  #allocation0 [shape = 'u32[]', space=smem, size = 0x4, offset = 0x4, fixed_abs, tag = 'smem constant byte address 0x4 - core index']
  #allocation1 [shape = 'u32[144,128]{1,0:T(1,128)}', space=vmem, size = 0x12000, scoped, tag = 'internal scratch']
  #allocation2 [shape = 'bf16[72,256]{1,0:T(8,128)(2,1)}', space=vmem, size = 0x9000, scoped, tag = 'scratch operand']
  %s0 = inlined_call_operand.vmem [shape: bf16[2,8,256], index: 0, kind: input, shape index: {}]
  %s1 = inlined_call_operand.hbm [shape: bf16[16,72], index: 1, kind: input, shape index: {}]
  %s2 = inlined_call_operand.vmem [shape: f32[16,1], index: 2, kind: input, shape index: {}]
  %s3 = inlined_call_operand.hbm [shape: f32[2,16,256], index: 3, kind: output, shape index: {}]
  %s4 = sld [smem:[#allocation0]]
  $region49: #{tpu_custom_call.1} parent=0
    _
  %s6 = ssub.s32 1, %s4
  %s7 = scalar_select 0, %s6, %s4
  $region1: #{tpu_custom_call.1} parent=0
    #allocation3 [shape = 'u8[4096]{0}', space=vmem, size = 0x1000, scoped, tag = 'input window, operand 1, single buffered']
    #allocation4 [shape = 's32[2]{0}', space=sflag, size = 0x8, scoped, tag = 'scoped memory for tpu_custom_call.1']
    #allocation5 [shape = 's32[2]{0}', space=sflag, size = 0x8, scoped, tag = 'scoped memory for tpu_custom_call.1']
    #allocation6 [shape = 'u8[32768]{0}', space=vmem, size = 0x8000, scoped, tag = 'output window, operand 0']
    %8 = vsyncpa [#allocation4], 0
    %9 = vsyncpa [#allocation5], 0
    %s10 = scalar_lea.sflag [#allocation5], 1
    %11 = vsyncpa %s10, 0
    loop: start=0, step=1, limit=4
    $region2: #{tpu_custom_call.1} parent=1 // loop_pre_header
      _
    $region3: #{tpu_custom_call.1} parent=1 // loop_header
      %s13 = sphi 0, %s17
      %p14 = scmp.ge.s32.totalorder %s13, 4
      %s23 = sphi 0, %s25
      %s26 = sphi 0, %s23
      %s27 = sphi 0, %s26
      %s43 = sphi 0, %s27
      %s47 = sphi 0, %s47
      %s49 = sphi 0, %s47
      %s50 = sphi 0, %s49
      %s64 = sphi 0, %s50
      %s68 = sphi 0, %s68
      %s70 = sphi 0, %s68
      %s71 = sphi 0, %s70
      %s85 = sphi 0, %s71
      %s91 = sphi 0, %s93
      %s94 = sphi 0, %s91
      %s95 = sphi 0, %s94
      %s111 = sphi 0, %s95
    $region4: #{tpu_custom_call.1} parent=1 // loop_header_branch
      %16 = sbr.rel (%p14) target = $region8
    $region5: #{tpu_custom_call.1} parent=1 // loop_body
      %s18 = ssub.s32 %s13, 1
      %s19 = ssub.s32 %s13, 2
      %s20 = sadd.s32 %s13, 1
      %s21 = ssub.s32 %s13, %s20
      %p22 = scmp.eq.s32.totalorder %s21, 0
      %s24 = sadd.s32 %s23, 1
      %s25 = scalar_select %p22, %s23, %s24
      %p28 = pneg %p22
      %p29 = scmp.eq.s32.totalorder %s13, 1
      %p30 = por %p28, %p29
      %p31 = scmp.ne.s32.totalorder %s23, %s26
      %p32 = scmp.eq.s32.totalorder %s13, 0
      %p33 = por %p31, %p32
      %p34 = scmp.ne.s32.totalorder %s23, %s26
      %p35 = scmp.eq.s32.totalorder %s18, 1
      %p36 = por %p34, %p35
      %p37 = scmp.ne.s32.totalorder %s26, %s27
      %p38 = scmp.eq.s32.totalorder %s18, 0
      %p39 = por %p37, %p38
      %p40 = scmp.ne.s32.totalorder %s26, %s27
      %p41 = scmp.eq.s32.totalorder %s19, 1
      %p42 = por %p40, %p41
      %p44 = scmp.ne.s32.totalorder %s27, %s43
      %p45 = scmp.eq.s32.totalorder %s19, 0
      %p46 = por %p44, %p45
      %s48 = sadd.s32 %s47, 1
      %p51 = scmp.eq.s32.totalorder %s13, 1
      %p52 = scmp.ne.s32.totalorder %s47, %s49
      %p53 = scmp.eq.s32.totalorder %s13, 0
      %p54 = por %p52, %p53
      %p55 = scmp.ne.s32.totalorder %s47, %s49
      %p56 = scmp.eq.s32.totalorder %s18, 1
      %p57 = por %p55, %p56
      %p58 = scmp.ne.s32.totalorder %s49, %s50
      %p59 = scmp.eq.s32.totalorder %s18, 0
      %p60 = por %p58, %p59
      %p61 = scmp.ne.s32.totalorder %s49, %s50
      %p62 = scmp.eq.s32.totalorder %s19, 1
      %p63 = por %p61, %p62
      %p65 = scmp.ne.s32.totalorder %s50, %s64
      %p66 = scmp.eq.s32.totalorder %s19, 0
      %p67 = por %p65, %p66
      %s69 = sadd.s32 %s68, 1
      %p72 = scmp.eq.s32.totalorder %s13, 1
      %p73 = scmp.ne.s32.totalorder %s68, %s70
      %p74 = scmp.eq.s32.totalorder %s13, 0
      %p75 = por %p73, %p74
      %p76 = scmp.ne.s32.totalorder %s68, %s70
      %p77 = scmp.eq.s32.totalorder %s18, 1
      %p78 = por %p76, %p77
      %p79 = scmp.ne.s32.totalorder %s70, %s71
      %p80 = scmp.eq.s32.totalorder %s18, 0
      %p81 = por %p79, %p80
      %p82 = scmp.ne.s32.totalorder %s70, %s71
      %p83 = scmp.eq.s32.totalorder %s19, 1
      %p84 = por %p82, %p83
      %p86 = scmp.ne.s32.totalorder %s71, %s85
      %p87 = scmp.eq.s32.totalorder %s19, 0
      %p88 = por %p86, %p87
      %s89 = ssub.s32 %s13, %s20
      %p90 = scmp.eq.s32.totalorder %s89, 0
      %s92 = sadd.s32 %s91, 1
      %s93 = scalar_select %p90, %s91, %s92
      %p96 = pneg %p90
      %p97 = scmp.eq.s32.totalorder %s13, 1
      %p98 = por %p96, %p97
      %p99 = scmp.ne.s32.totalorder %s91, %s94
      %p100 = scmp.eq.s32.totalorder %s13, 0
      %p101 = por %p99, %p100
      %p102 = scmp.ne.s32.totalorder %s91, %s94
      %p103 = scmp.eq.s32.totalorder %s18, 1
      %p104 = por %p102, %p103
      %p105 = scmp.ne.s32.totalorder %s94, %s95
      %p106 = scmp.eq.s32.totalorder %s18, 0
      %p107 = por %p105, %p106
      %p108 = scmp.ne.s32.totalorder %s94, %s95
      %p109 = scmp.eq.s32.totalorder %s19, 1
      %p110 = por %p108, %p109
      %p112 = scmp.ne.s32.totalorder %s95, %s111
      %p113 = scmp.eq.s32.totalorder %s19, 0
      %p114 = por %p112, %p113
      %p115 = scmp.le.s32.totalorder 1, %s13
      %p116 = scmp.lt.s32.totalorder %s13, 3
      %p117 = pnand %p115, %p116
      %p118 = pneg %p117
      // Predicated region
      $region9: #{tpu_custom_call.1} parent=5 // pred_check
        _
      $region10: #{tpu_custom_call.1} parent=5 // pred_check_branch
        %120 = sbr.rel (%p117) target = $region12
      $region11: #{tpu_custom_call.1} parent=5 // pred_region
        %s121 = ssub.s32 %s13, 1
        // Predicated region
        $region13: #{tpu_custom_call.1} parent=11 // pred_check
          %p122 = pneg %p60
        $region14: #{tpu_custom_call.1} parent=11 // pred_check_branch
          %124 = sbr.rel (%p122) target = $region16
        $region15: #{tpu_custom_call.1} parent=11 // pred_region
          %s126 = ssub.s32 128, 128
          %127 = vsyncadd [#allocation4], %s126
          %s128 = sshll.u32 [#allocation3], 4
          %s129 = int_to_ptr.vmem [resolvable:$true] %s128
          %134 = dma.hbm_to_vmem [thread:$0]  %s1, 128, %s129, [#allocation4], 64, 64, 4
        $region16: #{tpu_custom_call.1} parent=11 // pred_fallthru
          _
        // Predicated region
        $region17: #{tpu_custom_call.1} parent=11 // pred_check
          %p135 = pneg %p81
        $region18: #{tpu_custom_call.1} parent=11 // pred_check_branch
          %137 = sbr.rel (%p135) target = $region20
        $region19: #{tpu_custom_call.1} parent=11 // pred_region
          _
        $region20: #{tpu_custom_call.1} parent=11 // pred_fallthru
          _
      $region12: #{tpu_custom_call.1} parent=5 // pred_fallthru
        _
      %p138 = scmp.lt.s32.totalorder %s13, 2
      // Predicated region
      $region21: #{tpu_custom_call.1} parent=5 // pred_check
        %p139 = pneg %p138
      $region22: #{tpu_custom_call.1} parent=5 // pred_check_branch
        %141 = sbr.rel (%p139) target = $region24
      $region23: #{tpu_custom_call.1} parent=5 // pred_region
        // Predicated region
        $region25: #{tpu_custom_call.1} parent=23 // pred_check
          %p142 = pneg %p33
        $region26: #{tpu_custom_call.1} parent=23 // pred_check_branch
          %144 = sbr.rel (%p142) target = $region28
        $region27: #{tpu_custom_call.1} parent=23 // pred_region
          %p145 = scmp.lt.s32.totalorder %s13, 1
          %s146 = scalar_select %p145, %s13, 1
          %s147 = smul.addr %s146, 2
          %s148 = smul.addr %s147, 4
          %s149 = scalar_lea.vmem %s0, %s148
        $region28: #{tpu_custom_call.1} parent=23 // pred_fallthru
          _
      $region24: #{tpu_custom_call.1} parent=5 // pred_fallthru
        _
      %p150 = scmp.le.s32.totalorder 1, %s13
      %p151 = scmp.lt.s32.totalorder %s13, 3
      %p152 = pnand %p150, %p151
      %p153 = pneg %p152
      // Predicated region
      $region29: #{tpu_custom_call.1} parent=5 // pred_check
        _
      $region30: #{tpu_custom_call.1} parent=5 // pred_check_branch
        %155 = sbr.rel (%p152) target = $region32
      $region31: #{tpu_custom_call.1} parent=5 // pred_region
        %s156 = ssub.s32 %s13, 1
        // Predicated region
        $region33: #{tpu_custom_call.1} parent=31 // pred_check
          %p157 = pneg %p60
        $region34: #{tpu_custom_call.1} parent=31 // pred_check_branch
          %159 = sbr.rel (%p157) target = $region36
        $region35: #{tpu_custom_call.1} parent=31 // pred_region
          %160 = dma.done [#allocation4], 128
        $region36: #{tpu_custom_call.1} parent=31 // pred_fallthru
          _
        %p161 = scmp.lt.s32.totalorder %s18, 1
        %s162 = scalar_select %p161, %s18, 1
        %s163 = smul.addr %s162, 2
        %s164 = smul.addr %s163, 4
        %s165 = scalar_lea.vmem %s0, %s164
        %p166 = pneg %p39
        %p167 = pneg %p36
        %p168 = pneg %p60
        %p169 = pneg %p57
        %p170 = pneg %p81
        %p171 = pneg %p78
        %p172 = pneg %p107
        %p173 = pneg %p104
        %s174 = sand.u32 %s94, 1
        %s175 = scalar_lea.sflag [#allocation5], %s174
        %s176 = sand.u32 %s94, 1
        %s177 = smul.addr %s176, 32
        %s178 = scalar_lea.vmem [#allocation6], %s177
        %p179 = scmp.lt.s32.totalorder %s18, 1
        %s180 = scalar_select %p179, %s18, 1
        %s181 = smul.addr %s180, 2
        %s182 = smul.addr %s181, 4
        %s183 = scalar_lea.vmem %s0, %s182
        %v187 = vld [vmem:[%s183] sm:$0xff]
        %v188 = vlaneseq
        %v189 = vand.u32 %v188, 127
        %v190 = vadd.s32 %v189, 128
        %vm191 = vcmp.lt.s32.totalorder %v189, 0
        %v192 = vsub.s32 0, %v189
        %v193 = vsel %vm191, %v192, %v189
        %v194 = vshrl.u32 %v193, 4
        %v195 = vand.u32 %v193, 15
        %v196 = vsub.s32 0, %v195
        %v197 = vsel %vm191, %v196, %v195
        %vm198 = vcmp.lt.s32.totalorder %v190, 0
        %v199 = vsub.s32 0, %v190
        %v200 = vsel %vm198, %v199, %v190
        %v201 = vshrl.u32 %v200, 4
        %v202 = vand.u32 %v200, 15
        %v203 = vsub.s32 0, %v202
        %v204 = vsel %vm198, %v203, %v202
        %vm205 = vcmp.ne.s32.totalorder %v197, 0
        %vm206 = vcmp.ne.s32.totalorder %v204, 0
        %vm207 = vcmp.lt.s32.totalorder %v197, 0
        %vm208 = vcmp.lt.s32.totalorder %v204, 0
        %vm209 = vmand %vm207, %vm205
        %vm210 = vmand %vm208, %vm206
        %v211 = vadd.s32 %v197, 16
        %v212 = vadd.s32 %v204, 16
        %v213 = vsel %vm209, %v211, %v197
        %v214 = vsel %vm210, %v212, %v204
        %vm215 = vcmp.ne.s32.totalorder %v213, 0
        %vm216 = vcmp.ne.s32.totalorder %v214, 0
        %vm217 = vcmp.ne.s32.totalorder %v213, 15
        %vm218 = vcmp.ne.s32.totalorder %v214, 15
        %v220 = vunpack.c.l.b16 %v187
        %v221 = vunpack.c.h.b16 %v187
        %v222 = vpack.c.b16 %v220, %v220
        %v223 = vpack.c.b16 %v221, %v221
        %224 = vrot.lane.b32.xlu0 %v222, 17
        %v225 = vpop.permute.xlu0 %224
        %226 = vrot.lane.b32.xlu0 %v223, 17
        %v227 = vpop.permute.xlu0 %226
        %vm228 = vcmask 138240
        %v229 = vsel %vm228, %v225, %v227
        %vm231 = vcmask 138240
        %v234 = vsel %vm231, 0, %v225
        %v236 = vsel %vm215, 1, 0
        %v237 = vsel %vm216, 1, 0
        %vm238 = vcmp.eq.s32.totalorder %v236, 1
        %vm239 = vcmp.eq.s32.totalorder %v237, 1
        %vm240 = vmpackc.low %vm239, %vm238
        %v241 = vsel %vm240, 65537, 0
        %v242 = vlaneseq
        %v243 = vshrl.u32 %v242, 7
        %v244 = vsub.s32 0, %v243
        %v245 = vrot.slane %v241, %v244
        %v246 = vlaneseq
        %v247 = vshrl.u32 %v246, 7
        %v248 = vsub.s32 4, %v247
        %v249 = vrot.slane %v241, %v248
        %vm250 = vcmp.ne.s16.totalorder %v245, 0
        %vm251 = vcmp.ne.s16.totalorder %v249, 0
        %v252 = vsel %vm250, %v234, 0
        %v253 = vsel %vm251, %v229, 0
        %v256 = vunpack.c.l.b16 %v252
        %v257 = vunpack.c.l.b16 %v253
        %v258 = vpack.c.b16 %v257, %v256
        %260 = vst [vmem:[#allocation2] sm:$0xff] %v258
        %261 = vrot.lane.b32.xlu0 %v222, 16
        %v262 = vpop.permute.xlu0 %261
        %263 = vrot.lane.b32.xlu0 %v223, 16
        %v264 = vpop.permute.xlu0 %263
        %vm265 = vcmask 130048
        %v266 = vsel %vm265, %v262, %v264
        %vm267 = vcmask 130048
        %v269 = vsel %vm267, 0, %v262
        %v271 = vunpack.c.l.b16 %v269
        %v272 = vunpack.c.l.b16 %v266
        %v273 = vpack.c.b16 %v272, %v271
        %275 = vst [vmem:[#allocation2 + $0x8] sm:$0xff] %v273
        %276 = vrot.lane.b32.xlu0 %v222, 15
        %v277 = vpop.permute.xlu0 %276
        %278 = vrot.lane.b32.xlu0 %v223, 15
        %v279 = vpop.permute.xlu0 %278
        %vm280 = vcmask 121856
        %v281 = vsel %vm280, %v277, %v279
        %vm283 = vcmask 121856
        %v285 = vsel %vm283, 0, %v277
        %v287 = vsel %vm217, 1, 0
        %v288 = vsel %vm218, 1, 0
        %vm289 = vcmp.eq.s32.totalorder %v287, 1
        %vm290 = vcmp.eq.s32.totalorder %v288, 1
        %vm291 = vmpackc.low %vm290, %vm289
        %v292 = vsel %vm291, 65537, 0
        %v293 = vlaneseq
        %v294 = vshrl.u32 %v293, 7
        %v295 = vsub.s32 0, %v294
        %v296 = vrot.slane %v292, %v295
        %v297 = vlaneseq
        %v298 = vshrl.u32 %v297, 7
        %v299 = vsub.s32 4, %v298
        %v300 = vrot.slane %v292, %v299
        %vm301 = vcmp.ne.s16.totalorder %v296, 0
        %vm302 = vcmp.ne.s16.totalorder %v300, 0
        %v303 = vsel %vm301, %v285, 0
        %v304 = vsel %vm302, %v281, 0
        %v307 = vunpack.c.l.b16 %v303
        %v308 = vunpack.c.l.b16 %v304
        %v309 = vpack.c.b16 %v308, %v307
        %311 = vst [vmem:[#allocation2 + $0x10] sm:$0xff] %v309
        %312 = vrot.lane.b32.xlu0 %v222, 1
        %v313 = vpop.permute.xlu0 %312
        %314 = vrot.lane.b32.xlu0 %v223, 1
        %v315 = vpop.permute.xlu0 %314
        %vm316 = vcmask 7168
        %v317 = vsel %vm316, %v313, %v315
        %vm319 = vcmask 7168
        %v321 = vsel %vm319, 0, %v313
        %v323 = vsel %vm250, %v321, 0
        %v324 = vsel %vm251, %v317, 0
        %v327 = vunpack.c.l.b16 %v323
        %v328 = vunpack.c.l.b16 %v324
        %v329 = vpack.c.b16 %v328, %v327
        %331 = vst [vmem:[#allocation2 + $0x18] sm:$0xff] %v329
        %332 = vst [vmem:[#allocation2 + $0x20] sm:$0xff] %v187
        %333 = vrot.lane.b32.xlu0 %v222, 127
        %v334 = vpop.permute.xlu0 %333
        %335 = vrot.lane.b32.xlu0 %v223, 127
        %v336 = vpop.permute.xlu0 %335
        %vm337 = vcmask 1039360
        %v338 = vsel %vm337, %v334, %v336
        %vm340 = vcmask 1039360
        %v342 = vsel %vm340, %v336, 0
        %v344 = vsel %vm301, %v338, 0
        %v345 = vsel %vm302, %v342, 0
        %v348 = vunpack.c.l.b16 %v344
        %v349 = vunpack.c.l.b16 %v345
        %v350 = vpack.c.b16 %v349, %v348
        %352 = vst [vmem:[#allocation2 + $0x28] sm:$0xff] %v350
        %353 = vrot.lane.b32.xlu0 %v222, 113
        %v354 = vpop.permute.xlu0 %353
        %355 = vrot.lane.b32.xlu0 %v223, 113
        %v356 = vpop.permute.xlu0 %355
        %vm357 = vcmask 924672
        %v358 = vsel %vm357, %v354, %v356
        %vm360 = vcmask 924672
        %v362 = vsel %vm360, %v356, 0
        %v364 = vsel %vm250, %v358, 0
        %v365 = vsel %vm251, %v362, 0
        %v368 = vunpack.c.l.b16 %v364
        %v369 = vunpack.c.l.b16 %v365
        %v370 = vpack.c.b16 %v369, %v368
        %372 = vst [vmem:[#allocation2 + $0x30] sm:$0xff] %v370
        %373 = vrot.lane.b32.xlu0 %v222, 112
        %v374 = vpop.permute.xlu0 %373
        %375 = vrot.lane.b32.xlu0 %v223, 112
        %v376 = vpop.permute.xlu0 %375
        %vm377 = vcmask 916480
        %v378 = vsel %vm377, %v374, %v376
        %vm379 = vcmask 916480
        %v381 = vsel %vm379, %v376, 0
        %v383 = vunpack.c.l.b16 %v378
        %v384 = vunpack.c.l.b16 %v381
        %v385 = vpack.c.b16 %v384, %v383
        %387 = vst [vmem:[#allocation2 + $0x38] sm:$0xff] %v385
        %388 = vrot.lane.b32.xlu0 %v222, 111
        %v389 = vpop.permute.xlu0 %388
        %390 = vrot.lane.b32.xlu0 %v223, 111
        %v391 = vpop.permute.xlu0 %390
        %vm392 = vcmask 908288
        %v393 = vsel %vm392, %v389, %v391
        %vm395 = vcmask 908288
        %v397 = vsel %vm395, %v391, 0
        %v399 = vsel %vm301, %v393, 0
        %v400 = vsel %vm302, %v397, 0
        %v403 = vunpack.c.l.b16 %v399
        %v404 = vunpack.c.l.b16 %v400
        %v405 = vpack.c.b16 %v404, %v403
        %407 = vst [vmem:[#allocation2 + $0x40] sm:$0xff] %v405
        %v408 = vld [vmem:[#allocation3] sm:$0xf]
        %v409 = vld [vmem:[#allocation3 + $0x4] sm:$0xf]
        %v410 = vld [vmem:[#allocation2] sm:$0xff]
        %v411 = vld [vmem:[#allocation2 + $0x8] sm:$0xff]
        %v412 = vld [vmem:[#allocation2 + $0x10] sm:$0xff]
        %v413 = vld [vmem:[#allocation2 + $0x18] sm:$0xff]
        %v414 = vld [vmem:[#allocation2 + $0x20] sm:$0xff]
        %v415 = vld [vmem:[#allocation2 + $0x28] sm:$0xff]
        %v416 = vld [vmem:[#allocation2 + $0x30] sm:$0xff]
        %v417 = vld [vmem:[#allocation2 + $0x38] sm:$0xff]
        %v418 = vld [vmem:[#allocation2 + $0x40] sm:$0xff]
        %v419 = vld [vmem:[%s2] sm:$0xff]
        %v420 = vld [vmem:[%s2 + $0x8] sm:$0xff]
        %422 = vset.pattern.permute.xlu0 0
        %423 = vperm.xlu0 %422, %v419
        %v424 = vpop.permute.xlu0 %423
        %427 = vset.pattern.permute.xlu0 0
        %428 = vperm.xlu0 %427, %v420
        %v429 = vpop.permute.xlu0 %428
        %v433 = vunpack.c.l.b16 %v408
        %v434 = vunpack.c.l.b16 %v409
        %v435 = vpack.c.b16 %v434, %v433
        %v445 = vunpack.c.l.b16 %v410
        %v446 = vunpack.c.h.b16 %v410
        %v447 = vunpack.c.l.b16 %v411
        %v448 = vunpack.c.h.b16 %v411
        %v449 = vunpack.c.l.b16 %v412
        %v450 = vunpack.c.h.b16 %v412
        %v451 = vunpack.c.l.b16 %v413
        %v452 = vunpack.c.h.b16 %v413
        %v453 = vunpack.c.l.b16 %v414
        %v454 = vunpack.c.h.b16 %v414
        %v455 = vunpack.c.l.b16 %v415
        %v456 = vunpack.c.h.b16 %v415
        %v457 = vunpack.c.l.b16 %v416
        %v458 = vunpack.c.h.b16 %v416
        %v459 = vunpack.c.l.b16 %v417
        %v460 = vunpack.c.h.b16 %v417
        %v461 = vunpack.c.l.b16 %v418
        %v462 = vunpack.c.h.b16 %v418
        %v463 = vpack.c.b16 %v447, %v445
        %v464 = vpack.c.b16 %v448, %v446
        %v465 = vpack.c.b16 %v451, %v449
        %v466 = vpack.c.b16 %v452, %v450
        %v467 = vpack.c.b16 %v455, %v453
        %v468 = vpack.c.b16 %v456, %v454
        %v469 = vpack.c.b16 %v459, %v457
        %v470 = vpack.c.b16 %v460, %v458
        %v471 = vpack.c.b16 %v461, %v461
        %v472 = vpack.c.b16 %v462, %v462
        %vm481 = vcmask 588800
        %v483 = vsel %vm481, %v435, 0
        %vm485 = vcmask 1043456
        %v487 = vsel %vm485, %v471, 0
        %v490 = vsel %vm485, %v472, 0
        %492 = vmatprep.subr.bf16.mxu0 0
        %493 = vmatpush1.bf16.msra.mxu0 0
        %494 = vmatprep.subr.bf16.mxu0 0
        %495 = vmatpush1.bf16.msra.mxu0 0
        %496 = vmatprep.subr.bf16.mxu0 0
        %497 = vmatpush1.bf16.msra.mxu0 0
        %498 = vmatprep.subr.bf16.mxu0 %v490
        %499 = vmatpush1.bf16.msra.mxu0 %v487
        %500 = vmatprep.subr.bf16.mxu0 %v470
        %501 = vmatpush1.bf16.msra.mxu0 %v469
        %502 = vmatprep.subr.bf16.mxu0 %v468
        %503 = vmatpush1.bf16.msra.mxu0 %v467
        %504 = vmatprep.subr.bf16.mxu0 %v466
        %505 = vmatpush1.bf16.msra.mxu0 %v465
        %506 = vmatprep.subr.bf16.mxu0 %v464
        %507 = vmatpush1.bf16.msra.mxu0 %v463
        %508 = vmatprep.subr.bf16.mxu0 0
        %509 = vmatpush2.bf16.msra.mxu0 0
        %510 = vmatprep.subr.bf16.mxu0 0
        %511 = vmatpush2.bf16.msra.mxu0 0
        %512 = vmatprep.subr.bf16.mxu0 0
        %513 = vmatpush2.bf16.msra.mxu0 0
        %514 = vmatprep.subr.bf16.mxu0 0
        %515 = vmatpush2.bf16.msra.mxu0 0
        %516 = vmatprep.subr.bf16.mxu0 0
        %517 = vmatpush2.bf16.msra.mxu0 0
        %518 = vmatprep.subr.bf16.mxu0 0
        %519 = vmatpush2.bf16.msra.mxu0 0
        %520 = vmatprep.subr.bf16.mxu0 0
        %521 = vmatpush2.bf16.msra.mxu0 0
        %522 = vmatprep.subr.bf16.mxu0 0
        %523 = vmatpush2.bf16.msra.mxu0 0
        %524 = vmatprep.mubr.bf16.mxu0 0
        %525 = vmatmul.mubr.bf16.gmra.mxu0 %v483
        %v526 = vpop.f32.mrf.mxu0
        %v527 = vadd.f32 %v424, %v526
        %v528 = vpop.f32.mrf.mxu0
        %v529 = vadd.f32 %v424, %v528
        %v530 = vpop.f32.mrf.mxu0
        %v531 = vadd.f32 %v429, %v530
        %v532 = vpop.f32.mrf.mxu0
        %v533 = vadd.f32 %v429, %v532
        %534 = vdwg.mxu0
        %v535 = vmax.f32 %v527, 0.0
        %v536 = vmax.f32 %v529, 0.0
        %v537 = vmax.f32 %v531, 0.0
        %v538 = vmax.f32 %v533, 0.0
        %539 = vst [vmem:[%s178] sm:$0xff] %v535
        %540 = vst [vmem:[%s178 + $0x8] sm:$0xff] %v536
        %541 = vst [vmem:[%s178 + $0x10] sm:$0xff] %v537
        %542 = vst [vmem:[%s178 + $0x18] sm:$0xff] %v538
        %s543 = sand.u32 %s94, 1
        %s544 = scalar_lea.sflag [#allocation5], %s543
        %s545 = sand.u32 %s94, 1
        %s546 = smul.addr %s545, 32
        %s547 = scalar_lea.vmem [#allocation6], %s546
        // Predicated region
        $region37: #{tpu_custom_call.1} parent=31 // pred_check
          %p548 = pneg %p104
        $region38: #{tpu_custom_call.1} parent=31 // pred_check_branch
          %550 = sbr.rel (%p548) target = $region40
        $region39: #{tpu_custom_call.1} parent=31 // pred_region
          %s552 = ssub.s32 512, 512
          %553 = vsyncadd %s544, %s552
          %s554 = smul.addr %s18, 4
          %s555 = smul.addr %s554, 128
          %s556 = scalar_lea.hbm %s3, %s555
          %s557 = sshll.u32 %s547, 4
          %s558 = int_to_ptr.vmem [resolvable:$true] %s557
          %563 = dma.vmem_to_hbm [thread:$0]  %s558, 512, %s556, %s544, 256, 256, 16
        $region40: #{tpu_custom_call.1} parent=31 // pred_fallthru
          _
      $region32: #{tpu_custom_call.1} parent=5 // pred_fallthru
        _
      %p564 = scmp.le.s32.totalorder 2, %s13
      // Predicated region
      $region41: #{tpu_custom_call.1} parent=5 // pred_check
        %p565 = pneg %p564
      $region42: #{tpu_custom_call.1} parent=5 // pred_check_branch
        %567 = sbr.rel (%p565) target = $region44
      $region43: #{tpu_custom_call.1} parent=5 // pred_region
        %s568 = ssub.s32 %s13, 2
        // Predicated region
        $region45: #{tpu_custom_call.1} parent=43 // pred_check
          %p569 = pneg %p110
        $region46: #{tpu_custom_call.1} parent=43 // pred_check_branch
          %571 = sbr.rel (%p569) target = $region48
        $region47: #{tpu_custom_call.1} parent=43 // pred_region
          %s572 = sand.u32 %s95, 1
          %s573 = scalar_lea.sflag [#allocation5], %s572
          %s574 = sand.u32 %s95, 1
          %s575 = smul.addr %s574, 32
          %s576 = scalar_lea.vmem [#allocation6], %s575
          %577 = dma.done %s573, 512
        $region48: #{tpu_custom_call.1} parent=43 // pred_fallthru
          _
      $region44: #{tpu_custom_call.1} parent=5 // pred_fallthru
        _
    $region6: #{tpu_custom_call.1} parent=1 // loop_footer
      %s17 = sadd.s32 1, %s13
    $region7: #{tpu_custom_call.1} parent=1 // loop_footer_branch
      %12 = sbr.rel target = $region3
    $region8: #{tpu_custom_call.1} parent=1 // loop_exit
      _
    %578 = vsyncpa [#allocation4], 1
    %s579 = scalar_lea.sflag [#allocation4], 1
    %580 = vsyncpa %s579, 1
    %581 = vsyncpa [#allocation5], 1
    %s582 = scalar_lea.sflag [#allocation5], 1
    %583 = vsyncpa %s582, 1

</llo_original>
